<compile_context>
chip_gen: v6e
topology: v6e:2x2x1
jax: 0.10.0
libtpu: 0.0.40
codegen_flags: <defaults>
</compile_context>

<pallas_src>
import functools

import jax
import jax.numpy as jnp
from jax.experimental import pallas as pl
from jax.experimental.pallas import tpu as pltpu

LANE = 128
SUBLANE = 8


def _round_up(v, m):
    return (v + m - 1) // m * m


def _pad2d(a, rows, cols):
    r, c = a.shape
    return jnp.pad(a, ((0, rows - r), (0, cols - c)))


# ----------------------------- Pallas kernel --------------------------------

def _net_finger_kernel(x_ref, w1_ref, b1_ref, ws_ref, bs_ref, out_ref):
    """Entire Net_finger forward on one VMEM-resident batch tile.

    x_ref : [tm, n_feature] f32        w1_ref: [n_feature, H_pad] bf16
    b1_ref: [1, H_pad] f32             ws_ref: [8, H_pad, H_pad] bf16
    bs_ref: [8, 1, H_pad] f32          out_ref: [tm, H_pad] f32
      ws/bs order: h2, h3, h4, h5, h6, h7, h8, fused(num|layer) head.
    """

    def lin(h, w, b):
        # bf16 operands on the MXU, f32 accumulation; bias add in f32 (VPU).
        return jnp.dot(h.astype(jnp.bfloat16), w,
                       preferred_element_type=jnp.float32) + b

    def lin_relu(h, w, b):
        return jnp.maximum(lin(h, w, b), 0.0)

    h = lin_relu(x_ref[...], w1_ref[...], b1_ref[...])   # hidden1 + relu
    x = lin_relu(h, ws_ref[0], bs_ref[0])                # hidden2 + relu

    xx = lin_relu(x,  ws_ref[1], bs_ref[1])              # hidden3 + relu
    xx = lin_relu(xx, ws_ref[2], bs_ref[2])              # hidden4 + relu
    xx = lin_relu(xx, ws_ref[3], bs_ref[3])              # hidden5 + relu
    # TODO(synk): drop5 = torch.nn.Dropout(0.1) -> eval-mode identity.
    x = xx + x                                           # residual 1

    xxx = lin_relu(x,   ws_ref[4], bs_ref[4])            # hidden6 + relu
    xxx = lin_relu(xxx, ws_ref[5], bs_ref[5])            # hidden7 + relu
    xxx = lin_relu(xxx, ws_ref[6], bs_ref[6])            # hidden8 + relu
    # TODO(synk): drop8 = torch.nn.Dropout(0.1) -> eval-mode identity.
    x = xxx + x                                          # residual 2

    # Fused head: num in lanes 0..2, layer in lanes 3..7 of one tile.
    out_ref[...] = lin(x, ws_ref[7], bs_ref[7]).astype(out_ref.dtype)


# ------------------------------ JAX wrapper ----------------------------------

def prepare_packed_params(params):
    """Transpose / pad / pack all Linear (w, b) once, outside the kernel.

    params: [h1, h2, ..., h8, num, layer] as PyTorch-layout (w[out,in], b[out]).

    Returns (w1p, b1p, ws_stack, bs_stack):
      w1p      [n_feature, H_pad]  bf16   (K left un-padded -> short-K matmul)
      b1p      [1, H_pad]          f32
      ws_stack [8, H_pad, H_pad]   bf16   (h2..h8, fused num|layer head)
      bs_stack [8, 1, H_pad]       f32

    Zero padding is exact: padded weight rows/cols and biases are zero, and
    relu(0) = 0, so padded lanes never contaminate real outputs.
    """
    w1, b1 = params[0]
    n_feature = w1.shape[1]
    H_pad = _round_up(max(w.shape[0] for (w, _) in params[:8]), LANE)

    w1p = _pad2d(jnp.asarray(w1, jnp.float32).T, n_feature, H_pad).astype(jnp.bfloat16)
    b1p = _pad2d(jnp.asarray(b1, jnp.float32).reshape(1, -1), 1, H_pad)

    ws, bs = [], []
    for (w, b) in params[1:8]:                           # hidden2 .. hidden8
        ws.append(_pad2d(jnp.asarray(w, jnp.float32).T, H_pad, H_pad))
        bs.append(_pad2d(jnp.asarray(b, jnp.float32).reshape(1, -1), 1, H_pad))

    # Fused head: concat num (3 lanes) and layer (5 lanes) along the output dim.
    (wn, bn), (wl, bl) = params[8], params[9]
    w_head = jnp.concatenate([jnp.asarray(wn, jnp.float32).T,
                              jnp.asarray(wl, jnp.float32).T], axis=1)
    b_head = jnp.concatenate([jnp.asarray(bn, jnp.float32),
                              jnp.asarray(bl, jnp.float32)]).reshape(1, -1)
    ws.append(_pad2d(w_head, H_pad, H_pad))
    bs.append(_pad2d(b_head, 1, H_pad))

    ws_stack = jnp.stack(ws).astype(jnp.bfloat16)        # [8, H_pad, H_pad]
    bs_stack = jnp.stack(bs)                             # [8, 1, H_pad] f32
    return w1p, b1p, ws_stack, bs_stack


def net_finger_forward(x, packed, *, n_num=3, n_layer=5, tm=512):
    """x: [B, n_feature] float32 -> (num [B, 3], layer [B, 5])."""
    w1p, b1p, ws, bs = packed
    B, n_feature = x.shape
    H_pad = ws.shape[-1]

    m_pad = _round_up(max(B, SUBLANE), SUBLANE)
    tm = _round_up(min(tm, m_pad), SUBLANE)
    m_pad = _round_up(m_pad, tm)
    # Row-pad only; the feature (lane) dim is streamed un-padded.
    x_p = jnp.pad(x.astype(jnp.float32), ((0, m_pad - B), (0, 0)))

    out = pl.pallas_call(
        _net_finger_kernel,
        out_shape=jax.ShapeDtypeStruct((m_pad, H_pad), jnp.float32),
        grid=(m_pad // tm,),
        in_specs=[
            pl.BlockSpec((tm, n_feature), lambda i: (i, 0)),   # streamed batch tile
            pl.BlockSpec(w1p.shape, lambda i: (0, 0)),          # VMEM-resident
            pl.BlockSpec(b1p.shape, lambda i: (0, 0)),
            pl.BlockSpec(ws.shape, lambda i: (0, 0, 0)),
            pl.BlockSpec(bs.shape, lambda i: (0, 0, 0)),
        ],
        out_specs=pl.BlockSpec((tm, H_pad), lambda i: (i, 0)),  # lane-dense output
        compiler_params=pltpu.CompilerParams(
            dimension_semantics=("parallel",)),
    )(x_p, w1p, b1p, ws, bs)

    num = out[:B, :n_num]
    layer = out[:B, n_num:n_num + n_layer]
    return num, layer


# --------------------------- reference & init --------------------------------

def net_finger_ref(x, params):
    """Pure-JAX f32 reference (eval mode: dropouts are identity)."""
    def lin(h, wb):
        w, b = wb
        return h @ w.T + b

    def lin_relu(h, wb):
        return jnp.maximum(lin(h, wb), 0.0)

    p = params
    h = lin_relu(x, p[0])
    xr = lin_relu(h, p[1])
    xx = lin_relu(xr, p[2])
    xx = lin_relu(xx, p[3])
    xx = lin_relu(xx, p[4])
    xr = xx + xr
    xxx = lin_relu(xr, p[5])
    xxx = lin_relu(xxx, p[6])
    xxx = lin_relu(xxx, p[7])
    xr = xxx + xr
    return lin(xr, p[8]), lin(xr, p[9])


def init_params(key, n_feature, n_hidden1, n_hidden2):
    """Deterministic init mimicking PyTorch's default uniform(-1/sqrt(fan_in), ...)."""
    def layer(k, out_f, in_f):
        kw, kb = jax.random.split(k)
        bound = 1.0 / (in_f ** 0.5)
        w = jax.random.uniform(kw, (out_f, in_f), jnp.float32, -bound, bound)
        b = jax.random.uniform(kb, (out_f,), jnp.float32, -bound, bound)
        return (w, b)

    ks = jax.random.split(key, 10)
    dims = [(n_hidden1, n_feature), (n_hidden2, n_hidden1)] + \
           [(n_hidden2, n_hidden2)] * 6 + [(3, n_hidden2), (5, n_hidden2)]
    return [layer(k, o, i) for k, (o, i) in zip(ks, dims)]


if __name__ == "__main__":
    key = jax.random.PRNGKey(0)
    kx, kp = jax.random.split(key)

    B, n_feature, n_hidden1, n_hidden2 = 2, 16, 32, 32
    x = jax.random.normal(kx, (B, n_feature), dtype=jnp.float32)
    params = init_params(kp, n_feature, n_hidden1, n_hidden2)
    packed = prepare_packed_params(params)

    fwd = jax.jit(functools.partial(net_finger_forward, n_num=3, n_layer=5))
    num, layer = fwd(x, packed)
    num, layer = jax.block_until_ready((num, layer))

    assert num.shape == (B, 3)
    assert layer.shape == (B, 5)

    # Loose tolerance: kernel uses bf16 MXU operands (f32 accumulation) vs the
    # pure-f32 reference; values here are O(0.1-1), so 5e-2 is a comfortable
    # margin while still catching any structural / packing error.
    num_ref, layer_ref = net_finger_ref(x, params)
    assert jnp.allclose(num, num_ref, atol=5e-2, rtol=5e-2)
    assert jnp.allclose(layer, layer_ref, atol=5e-2, rtol=5e-2)

    print("KERNEL_OK")
</pallas_src>

<mosaic_0001>
module attributes {stable_mosaic.version = 11 : i64} {
  func.func @_net_finger_kernel(%arg0: i32, %arg1: memref<8x16xf32, #tpu.memory_space<vmem>>, %arg2: memref<16x128xbf16, #tpu.memory_space<vmem>>, %arg3: memref<1x128xf32, #tpu.memory_space<vmem>>, %arg4: memref<8x128x128xbf16, #tpu.memory_space<vmem>>, %arg5: memref<8x1x128xf32, #tpu.memory_space<vmem>>, %arg6: memref<8x128xf32, #tpu.memory_space<vmem>>) attributes {dimension_semantics = [#tpu.dimension_semantics<parallel>], iteration_bounds = array<i64: 1>, scalar_prefetch = 0 : i64, scratch_operands = 0 : i64, tpu.core_type = #tpu.core_type<tc>, window_params = [{transform_indices = @transform_0, window_bounds = array<i64: 8, 16>}, {pipeline_mode = #tpu.pipeline_mode<synchronous>, transform_indices = @transform_1, window_bounds = array<i64: 16, 128>}, {pipeline_mode = #tpu.pipeline_mode<synchronous>, transform_indices = @transform_2, window_bounds = array<i64: 1, 128>}, {pipeline_mode = #tpu.pipeline_mode<synchronous>, transform_indices = @transform_3, window_bounds = array<i64: 8, 128, 128>}, {pipeline_mode = #tpu.pipeline_mode<synchronous>, transform_indices = @transform_4, window_bounds = array<i64: 8, 1, 128>}, {transform_indices = @transform_5, window_bounds = array<i64: 8, 128>}]} {
    %c0 = arith.constant 0 : index
    %c0_0 = arith.constant 0 : index
    %0 = vector.load %arg1[%c0, %c0_0] : memref<8x16xf32, #tpu.memory_space<vmem>>, vector<8x16xf32>
    %c0_1 = arith.constant 0 : index
    %c0_2 = arith.constant 0 : index
    %1 = vector.load %arg2[%c0_1, %c0_2] : memref<16x128xbf16, #tpu.memory_space<vmem>>, vector<16x128xbf16>
    %c0_3 = arith.constant 0 : index
    %c0_4 = arith.constant 0 : index
    %2 = vector.load %arg3[%c0_3, %c0_4] : memref<1x128xf32, #tpu.memory_space<vmem>>, vector<1x128xf32>
    %3 = arith.truncf %0 : vector<8x16xf32> to vector<8x16xbf16>
    %cst = arith.constant dense<0.000000e+00> : vector<8x128xf32>
    %4 = tpu.matmul %3, %1, %cst {dimension_numbers = #tpu.dot_dimension_numbers<[1], [0], [0], [1], [0, 0, 1, 1], [], []>} : vector<8x16xbf16>, vector<16x128xbf16>, vector<8x128xf32> -> vector<8x128xf32>
    %5 = vector.broadcast %2 : vector<1x128xf32> to vector<8x128xf32>
    %6 = arith.addf %4, %5 : vector<8x128xf32>
    %cst_5 = arith.constant 0.000000e+00 : f32
    %7 = vector.broadcast %cst_5 : f32 to vector<8x128xf32>
    %8 = arith.maximumf %6, %7 : vector<8x128xf32>
    %c0_6 = arith.constant 0 : index
    %c0_7 = arith.constant 0 : index
    %c0_8 = arith.constant 0 : index
    %9 = vector.load %arg4[%c0_6, %c0_7, %c0_8] : memref<8x128x128xbf16, #tpu.memory_space<vmem>>, vector<1x128x128xbf16>
    %10 = vector.shape_cast %9 : vector<1x128x128xbf16> to vector<128x128xbf16>
    %c0_9 = arith.constant 0 : index
    %c0_10 = arith.constant 0 : index
    %c0_11 = arith.constant 0 : index
    %11 = vector.load %arg5[%c0_9, %c0_10, %c0_11] : memref<8x1x128xf32, #tpu.memory_space<vmem>>, vector<1x1x128xf32>
    %12 = vector.shape_cast %11 : vector<1x1x128xf32> to vector<1x128xf32>
    %13 = arith.truncf %8 : vector<8x128xf32> to vector<8x128xbf16>
    %cst_12 = arith.constant dense<0.000000e+00> : vector<8x128xf32>
    %14 = tpu.matmul %13, %10, %cst_12 {dimension_numbers = #tpu.dot_dimension_numbers<[1], [0], [0], [1], [0, 0, 1, 1], [], []>} : vector<8x128xbf16>, vector<128x128xbf16>, vector<8x128xf32> -> vector<8x128xf32>
    %15 = vector.broadcast %12 : vector<1x128xf32> to vector<8x128xf32>
    %16 = arith.addf %14, %15 : vector<8x128xf32>
    %cst_13 = arith.constant 0.000000e+00 : f32
    %17 = vector.broadcast %cst_13 : f32 to vector<8x128xf32>
    %18 = arith.maximumf %16, %17 : vector<8x128xf32>
    %c1 = arith.constant 1 : index
    %c0_14 = arith.constant 0 : index
    %c0_15 = arith.constant 0 : index
    %19 = vector.load %arg4[%c1, %c0_14, %c0_15] : memref<8x128x128xbf16, #tpu.memory_space<vmem>>, vector<1x128x128xbf16>
    %20 = vector.shape_cast %19 : vector<1x128x128xbf16> to vector<128x128xbf16>
    %c1_16 = arith.constant 1 : index
    %c0_17 = arith.constant 0 : index
    %c0_18 = arith.constant 0 : index
    %21 = vector.load %arg5[%c1_16, %c0_17, %c0_18] : memref<8x1x128xf32, #tpu.memory_space<vmem>>, vector<1x1x128xf32>
    %22 = vector.shape_cast %21 : vector<1x1x128xf32> to vector<1x128xf32>
    %23 = arith.truncf %18 : vector<8x128xf32> to vector<8x128xbf16>
    %cst_19 = arith.constant dense<0.000000e+00> : vector<8x128xf32>
    %24 = tpu.matmul %23, %20, %cst_19 {dimension_numbers = #tpu.dot_dimension_numbers<[1], [0], [0], [1], [0, 0, 1, 1], [], []>} : vector<8x128xbf16>, vector<128x128xbf16>, vector<8x128xf32> -> vector<8x128xf32>
    %25 = vector.broadcast %22 : vector<1x128xf32> to vector<8x128xf32>
    %26 = arith.addf %24, %25 : vector<8x128xf32>
    %cst_20 = arith.constant 0.000000e+00 : f32
    %27 = vector.broadcast %cst_20 : f32 to vector<8x128xf32>
    %28 = arith.maximumf %26, %27 : vector<8x128xf32>
    %c2 = arith.constant 2 : index
    %c0_21 = arith.constant 0 : index
    %c0_22 = arith.constant 0 : index
    %29 = vector.load %arg4[%c2, %c0_21, %c0_22] : memref<8x128x128xbf16, #tpu.memory_space<vmem>>, vector<1x128x128xbf16>
    %30 = vector.shape_cast %29 : vector<1x128x128xbf16> to vector<128x128xbf16>
    %c2_23 = arith.constant 2 : index
    %c0_24 = arith.constant 0 : index
    %c0_25 = arith.constant 0 : index
    %31 = vector.load %arg5[%c2_23, %c0_24, %c0_25] : memref<8x1x128xf32, #tpu.memory_space<vmem>>, vector<1x1x128xf32>
    %32 = vector.shape_cast %31 : vector<1x1x128xf32> to vector<1x128xf32>
    %33 = arith.truncf %28 : vector<8x128xf32> to vector<8x128xbf16>
    %cst_26 = arith.constant dense<0.000000e+00> : vector<8x128xf32>
    %34 = tpu.matmul %33, %30, %cst_26 {dimension_numbers = #tpu.dot_dimension_numbers<[1], [0], [0], [1], [0, 0, 1, 1], [], []>} : vector<8x128xbf16>, vector<128x128xbf16>, vector<8x128xf32> -> vector<8x128xf32>
    %35 = vector.broadcast %32 : vector<1x128xf32> to vector<8x128xf32>
    %36 = arith.addf %34, %35 : vector<8x128xf32>
    %cst_27 = arith.constant 0.000000e+00 : f32
    %37 = vector.broadcast %cst_27 : f32 to vector<8x128xf32>
    %38 = arith.maximumf %36, %37 : vector<8x128xf32>
    %c3 = arith.constant 3 : index
    %c0_28 = arith.constant 0 : index
    %c0_29 = arith.constant 0 : index
    %39 = vector.load %arg4[%c3, %c0_28, %c0_29] : memref<8x128x128xbf16, #tpu.memory_space<vmem>>, vector<1x128x128xbf16>
    %40 = vector.shape_cast %39 : vector<1x128x128xbf16> to vector<128x128xbf16>
    %c3_30 = arith.constant 3 : index
    %c0_31 = arith.constant 0 : index
    %c0_32 = arith.constant 0 : index
    %41 = vector.load %arg5[%c3_30, %c0_31, %c0_32] : memref<8x1x128xf32, #tpu.memory_space<vmem>>, vector<1x1x128xf32>
    %42 = vector.shape_cast %41 : vector<1x1x128xf32> to vector<1x128xf32>
    %43 = arith.truncf %38 : vector<8x128xf32> to vector<8x128xbf16>
    %cst_33 = arith.constant dense<0.000000e+00> : vector<8x128xf32>
    %44 = tpu.matmul %43, %40, %cst_33 {dimension_numbers = #tpu.dot_dimension_numbers<[1], [0], [0], [1], [0, 0, 1, 1], [], []>} : vector<8x128xbf16>, vector<128x128xbf16>, vector<8x128xf32> -> vector<8x128xf32>
    %45 = vector.broadcast %42 : vector<1x128xf32> to vector<8x128xf32>
    %46 = arith.addf %44, %45 : vector<8x128xf32>
    %cst_34 = arith.constant 0.000000e+00 : f32
    %47 = vector.broadcast %cst_34 : f32 to vector<8x128xf32>
    %48 = arith.maximumf %46, %47 : vector<8x128xf32>
    %49 = arith.addf %48, %18 : vector<8x128xf32>
    %c4 = arith.constant 4 : index
    %c0_35 = arith.constant 0 : index
    %c0_36 = arith.constant 0 : index
    %50 = vector.load %arg4[%c4, %c0_35, %c0_36] : memref<8x128x128xbf16, #tpu.memory_space<vmem>>, vector<1x128x128xbf16>
    %51 = vector.shape_cast %50 : vector<1x128x128xbf16> to vector<128x128xbf16>
    %c4_37 = arith.constant 4 : index
    %c0_38 = arith.constant 0 : index
    %c0_39 = arith.constant 0 : index
    %52 = vector.load %arg5[%c4_37, %c0_38, %c0_39] : memref<8x1x128xf32, #tpu.memory_space<vmem>>, vector<1x1x128xf32>
    %53 = vector.shape_cast %52 : vector<1x1x128xf32> to vector<1x128xf32>
    %54 = arith.truncf %49 : vector<8x128xf32> to vector<8x128xbf16>
    %cst_40 = arith.constant dense<0.000000e+00> : vector<8x128xf32>
    %55 = tpu.matmul %54, %51, %cst_40 {dimension_numbers = #tpu.dot_dimension_numbers<[1], [0], [0], [1], [0, 0, 1, 1], [], []>} : vector<8x128xbf16>, vector<128x128xbf16>, vector<8x128xf32> -> vector<8x128xf32>
    %56 = vector.broadcast %53 : vector<1x128xf32> to vector<8x128xf32>
    %57 = arith.addf %55, %56 : vector<8x128xf32>
    %cst_41 = arith.constant 0.000000e+00 : f32
    %58 = vector.broadcast %cst_41 : f32 to vector<8x128xf32>
    %59 = arith.maximumf %57, %58 : vector<8x128xf32>
    %c5 = arith.constant 5 : index
    %c0_42 = arith.constant 0 : index
    %c0_43 = arith.constant 0 : index
    %60 = vector.load %arg4[%c5, %c0_42, %c0_43] : memref<8x128x128xbf16, #tpu.memory_space<vmem>>, vector<1x128x128xbf16>
    %61 = vector.shape_cast %60 : vector<1x128x128xbf16> to vector<128x128xbf16>
    %c5_44 = arith.constant 5 : index
    %c0_45 = arith.constant 0 : index
    %c0_46 = arith.constant 0 : index
    %62 = vector.load %arg5[%c5_44, %c0_45, %c0_46] : memref<8x1x128xf32, #tpu.memory_space<vmem>>, vector<1x1x128xf32>
    %63 = vector.shape_cast %62 : vector<1x1x128xf32> to vector<1x128xf32>
    %64 = arith.truncf %59 : vector<8x128xf32> to vector<8x128xbf16>
    %cst_47 = arith.constant dense<0.000000e+00> : vector<8x128xf32>
    %65 = tpu.matmul %64, %61, %cst_47 {dimension_numbers = #tpu.dot_dimension_numbers<[1], [0], [0], [1], [0, 0, 1, 1], [], []>} : vector<8x128xbf16>, vector<128x128xbf16>, vector<8x128xf32> -> vector<8x128xf32>
    %66 = vector.broadcast %63 : vector<1x128xf32> to vector<8x128xf32>
    %67 = arith.addf %65, %66 : vector<8x128xf32>
    %cst_48 = arith.constant 0.000000e+00 : f32
    %68 = vector.broadcast %cst_48 : f32 to vector<8x128xf32>
    %69 = arith.maximumf %67, %68 : vector<8x128xf32>
    %c6 = arith.constant 6 : index
    %c0_49 = arith.constant 0 : index
    %c0_50 = arith.constant 0 : index
    %70 = vector.load %arg4[%c6, %c0_49, %c0_50] : memref<8x128x128xbf16, #tpu.memory_space<vmem>>, vector<1x128x128xbf16>
    %71 = vector.shape_cast %70 : vector<1x128x128xbf16> to vector<128x128xbf16>
    %c6_51 = arith.constant 6 : index
    %c0_52 = arith.constant 0 : index
    %c0_53 = arith.constant 0 : index
    %72 = vector.load %arg5[%c6_51, %c0_52, %c0_53] : memref<8x1x128xf32, #tpu.memory_space<vmem>>, vector<1x1x128xf32>
    %73 = vector.shape_cast %72 : vector<1x1x128xf32> to vector<1x128xf32>
    %74 = arith.truncf %69 : vector<8x128xf32> to vector<8x128xbf16>
    %cst_54 = arith.constant dense<0.000000e+00> : vector<8x128xf32>
    %75 = tpu.matmul %74, %71, %cst_54 {dimension_numbers = #tpu.dot_dimension_numbers<[1], [0], [0], [1], [0, 0, 1, 1], [], []>} : vector<8x128xbf16>, vector<128x128xbf16>, vector<8x128xf32> -> vector<8x128xf32>
    %76 = vector.broadcast %73 : vector<1x128xf32> to vector<8x128xf32>
    %77 = arith.addf %75, %76 : vector<8x128xf32>
    %cst_55 = arith.constant 0.000000e+00 : f32
    %78 = vector.broadcast %cst_55 : f32 to vector<8x128xf32>
    %79 = arith.maximumf %77, %78 : vector<8x128xf32>
    %80 = arith.addf %79, %49 : vector<8x128xf32>
    %c7 = arith.constant 7 : index
    %c0_56 = arith.constant 0 : index
    %c0_57 = arith.constant 0 : index
    %81 = vector.load %arg4[%c7, %c0_56, %c0_57] : memref<8x128x128xbf16, #tpu.memory_space<vmem>>, vector<1x128x128xbf16>
    %82 = vector.shape_cast %81 : vector<1x128x128xbf16> to vector<128x128xbf16>
    %c7_58 = arith.constant 7 : index
    %c0_59 = arith.constant 0 : index
    %c0_60 = arith.constant 0 : index
    %83 = vector.load %arg5[%c7_58, %c0_59, %c0_60] : memref<8x1x128xf32, #tpu.memory_space<vmem>>, vector<1x1x128xf32>
    %84 = vector.shape_cast %83 : vector<1x1x128xf32> to vector<1x128xf32>
    %85 = arith.truncf %80 : vector<8x128xf32> to vector<8x128xbf16>
    %cst_61 = arith.constant dense<0.000000e+00> : vector<8x128xf32>
    %86 = tpu.matmul %85, %82, %cst_61 {dimension_numbers = #tpu.dot_dimension_numbers<[1], [0], [0], [1], [0, 0, 1, 1], [], []>} : vector<8x128xbf16>, vector<128x128xbf16>, vector<8x128xf32> -> vector<8x128xf32>
    %87 = vector.broadcast %84 : vector<1x128xf32> to vector<8x128xf32>
    %88 = arith.addf %86, %87 : vector<8x128xf32>
    %c0_62 = arith.constant 0 : index
    %c0_63 = arith.constant 0 : index
    %89 = vector.load %arg6[%c0_62, %c0_63] : memref<8x128xf32, #tpu.memory_space<vmem>>, vector<8x128xf32>
    tpu.vector_store %arg6[%c0_62, %c0_63], %88 {strides = array<i32>} : memref<8x128xf32, #tpu.memory_space<vmem>>, vector<8x128xf32>,
    return
  }
  func.func @transform_0(%arg0: i32) -> (i32, i32) {
    %c0_i32 = arith.constant 0 : i32
    %c0_i32_0 = arith.constant 0 : i32
    return %arg0, %c0_i32 : i32, i32
  }
  func.func @transform_1(%arg0: i32) -> (i32, i32) {
    %c0_i32 = arith.constant 0 : i32
    %c0_i32_0 = arith.constant 0 : i32
    %c0_i32_1 = arith.constant 0 : i32
    return %c0_i32, %c0_i32_0 : i32, i32
  }
  func.func @transform_2(%arg0: i32) -> (i32, i32) {
    %c0_i32 = arith.constant 0 : i32
    %c0_i32_0 = arith.constant 0 : i32
    %c0_i32_1 = arith.constant 0 : i32
    return %c0_i32, %c0_i32_0 : i32, i32
  }
  func.func @transform_3(%arg0: i32) -> (i32, i32, i32) {
    %c0_i32 = arith.constant 0 : i32
    %c0_i32_0 = arith.constant 0 : i32
    %c0_i32_1 = arith.constant 0 : i32
    %c0_i32_2 = arith.constant 0 : i32
    return %c0_i32, %c0_i32_0, %c0_i32_1 : i32, i32, i32
  }
  func.func @transform_4(%arg0: i32) -> (i32, i32, i32) {
    %c0_i32 = arith.constant 0 : i32
    %c0_i32_0 = arith.constant 0 : i32
    %c0_i32_1 = arith.constant 0 : i32
    %c0_i32_2 = arith.constant 0 : i32
    return %c0_i32, %c0_i32_0, %c0_i32_1 : i32, i32, i32
  }
  func.func @transform_5(%arg0: i32) -> (i32, i32) {
    %c0_i32 = arith.constant 0 : i32
    %c0_i32_0 = arith.constant 0 : i32
    return %arg0, %c0_i32 : i32, i32
  }
}

</mosaic_0001>

<llo_original>
// kernel: net_finger_forward.1
$region0: #{net_finger_forward.1}
  #allocation0 [shape = 'u32[]', space=smem, size = 0x4, offset = 0x4, fixed_abs, tag = 'smem constant byte address 0x4 - core index']
  #allocation1 [shape = 'u32[144,128]{1,0:T(1,128)}', space=vmem, size = 0x12000, scoped, tag = 'internal scratch']
  %s0 = inlined_call_operand.vmem [shape: f32[8,16], index: 0, kind: input, shape index: {}]
  %s1 = inlined_call_operand.vmem [shape: bf16[16,128], index: 1, kind: input, shape index: {}]
  %s2 = inlined_call_operand.hbm [shape: f32[1,128], index: 2, kind: input, shape index: {}]
  %s3 = inlined_call_operand.hbm [shape: bf16[8,128,128], index: 3, kind: input, shape index: {}]
  %s4 = inlined_call_operand.vmem [shape: f32[8,1,128], index: 4, kind: input, shape index: {}]
  %s5 = inlined_call_operand.vmem [shape: f32[8,128], index: 5, kind: output, shape index: {}]
  %s6 = sld [smem:[#allocation0]]
  $region38: #{net_finger_forward.1} parent=0
    _
  %s8 = ssub.s32 1, %s6
  %s9 = scalar_select 0, %s8, %s6
  $region1: #{net_finger_forward.1} parent=0
    #allocation2 [shape = 'u8[512]{0}', space=vmem, size = 0x400, scoped, tag = 'input window, operand 2, single buffered']
    #allocation3 [shape = 's32[1]{0}', space=sflag, size = 0x4, scoped, tag = 'scoped memory for net_finger_forward.1']
    #allocation4 [shape = 'u8[262144]{0}', space=vmem, size = 0x40000, scoped, tag = 'input window, operand 3, single buffered']
    #allocation5 [shape = 's32[1]{0}', space=sflag, size = 0x4, scoped, tag = 'scoped memory for net_finger_forward.1']
    %10 = vsyncpa [#allocation3], 0
    %11 = vsyncpa [#allocation5], 0
    // Predicated region
    $region2: #{net_finger_forward.1} parent=1 // pred_check
      _
    $region3: #{net_finger_forward.1} parent=1 // pred_check_branch
      %13 = sbr.rel (0) target = $region5
    $region4: #{net_finger_forward.1} parent=1 // pred_region
      _
    $region5: #{net_finger_forward.1} parent=1 // pred_fallthru
      _
    // Predicated region
    $region6: #{net_finger_forward.1} parent=1 // pred_check
      _
    $region7: #{net_finger_forward.1} parent=1 // pred_check_branch
      %15 = sbr.rel (0) target = $region9
    $region8: #{net_finger_forward.1} parent=1 // pred_region
      _
    $region9: #{net_finger_forward.1} parent=1 // pred_fallthru
      _
    // Predicated region
    $region10: #{net_finger_forward.1} parent=1 // pred_check
      _
    $region11: #{net_finger_forward.1} parent=1 // pred_check_branch
      %17 = sbr.rel (0) target = $region13
    $region12: #{net_finger_forward.1} parent=1 // pred_region
      %s19 = ssub.s32 16, 16
      %20 = vsyncadd [#allocation3], %s19
      %s22 = sshll.u32 [#allocation2], 4
      %s23 = int_to_ptr.vmem [resolvable:$true] %s22
      %25 = dma.hbm_to_vmem [thread:$0]  %s2, 16, %s23, [#allocation3]
    $region13: #{net_finger_forward.1} parent=1 // pred_fallthru
      _
    // Predicated region
    $region14: #{net_finger_forward.1} parent=1 // pred_check
      _
    $region15: #{net_finger_forward.1} parent=1 // pred_check_branch
      %27 = sbr.rel (0) target = $region17
    $region16: #{net_finger_forward.1} parent=1 // pred_region
      %s29 = ssub.s32 8192, 8192
      %30 = vsyncadd [#allocation5], %s29
      %s31 = sshll.u32 [#allocation4], 4
      %s32 = int_to_ptr.vmem [resolvable:$true] %s31
      %37 = dma.hbm_to_vmem [thread:$0]  %s3, 8192, %s32, [#allocation5], 64, 64, 4
    $region17: #{net_finger_forward.1} parent=1 // pred_fallthru
      _
    // Predicated region
    $region18: #{net_finger_forward.1} parent=1 // pred_check
      _
    $region19: #{net_finger_forward.1} parent=1 // pred_check_branch
      %39 = sbr.rel (0) target = $region21
    $region20: #{net_finger_forward.1} parent=1 // pred_region
      _
    $region21: #{net_finger_forward.1} parent=1 // pred_fallthru
      _
    // Predicated region
    $region22: #{net_finger_forward.1} parent=1 // pred_check
      _
    $region23: #{net_finger_forward.1} parent=1 // pred_check_branch
      %41 = sbr.rel (0) target = $region25
    $region24: #{net_finger_forward.1} parent=1 // pred_region
      %42 = dma.done [#allocation3], 16
    $region25: #{net_finger_forward.1} parent=1 // pred_fallthru
      _
    // Predicated region
    $region26: #{net_finger_forward.1} parent=1 // pred_check
      _
    $region27: #{net_finger_forward.1} parent=1 // pred_check_branch
      %44 = sbr.rel (0) target = $region29
    $region28: #{net_finger_forward.1} parent=1 // pred_region
      %45 = dma.done [#allocation5], 8192
    $region29: #{net_finger_forward.1} parent=1 // pred_fallthru
      _
    %v47 = vld [vmem:[%s0] sm:$0xff]
    %v48 = vld [vmem:[%s1] sm:$0xf]
    %v49 = vld [vmem:[%s1 + $0x4] sm:$0xf]
    %v50 = vld [vmem:[#allocation2] sm:$0x1]
    %v51 = vpack.c.bf16 %v47, %v47
    %v53 = vlaneseq
    %v54 = vshrl.u32 %v53, 7
    %v55 = vsub.s32 0, %v54
    %v56 = vrot.slane %v50, %v55
    %v60 = vunpack.c.l.b16 %v48
    %v61 = vunpack.c.l.b16 %v49
    %v62 = vpack.c.b16 %v61, %v60
    %vm64 = vcmask 130048
    %v66 = vsel %vm64, %v51, 0
    %68 = vmatprep.subr.bf16.mxu0 0
    %69 = vmatpush1.bf16.msra.mxu0 0
    %70 = vmatprep.subr.bf16.mxu0 0
    %71 = vmatpush1.bf16.msra.mxu0 0
    %72 = vmatprep.subr.bf16.mxu0 0
    %73 = vmatpush1.bf16.msra.mxu0 0
    %74 = vmatprep.subr.bf16.mxu0 0
    %75 = vmatpush1.bf16.msra.mxu0 0
    %76 = vmatprep.subr.bf16.mxu0 0
    %77 = vmatpush1.bf16.msra.mxu0 0
    %78 = vmatprep.subr.bf16.mxu0 0
    %79 = vmatpush1.bf16.msra.mxu0 0
    %80 = vmatprep.subr.bf16.mxu0 0
    %81 = vmatpush1.bf16.msra.mxu0 0
    %82 = vmatprep.subr.bf16.mxu0 0
    %83 = vmatpush1.bf16.msra.mxu0 %v62
    %84 = vmatprep.subr.bf16.mxu0 0
    %85 = vmatpush2.bf16.msra.mxu0 0
    %86 = vmatprep.subr.bf16.mxu0 0
    %87 = vmatpush2.bf16.msra.mxu0 0
    %88 = vmatprep.subr.bf16.mxu0 0
    %89 = vmatpush2.bf16.msra.mxu0 0
    %90 = vmatprep.subr.bf16.mxu0 0
    %91 = vmatpush2.bf16.msra.mxu0 0
    %92 = vmatprep.subr.bf16.mxu0 0
    %93 = vmatpush2.bf16.msra.mxu0 0
    %94 = vmatprep.subr.bf16.mxu0 0
    %95 = vmatpush2.bf16.msra.mxu0 0
    %96 = vmatprep.subr.bf16.mxu0 0
    %97 = vmatpush2.bf16.msra.mxu0 0
    %98 = vmatprep.subr.bf16.mxu0 0
    %99 = vmatpush2.bf16.msra.mxu0 0
    %100 = vmatprep.mubr.bf16.mxu0 0
    %101 = vmatmul.mubr.bf16.gmra.mxu0 %v66
    %v102 = vpop.f32.mrf.mxu0
    %v103 = vadd.f32 %v56, %v102
    %v104 = vpop.f32.mrf.mxu0
    %v105 = vpop.f32.mrf.mxu0
    %v106 = vpop.f32.mrf.mxu0
    %107 = vdwg.mxu0
    %v108 = vmax.f32 %v103, 0.0
    %v109 = vld [vmem:[#allocation4] sm:$0xf]
    %v110 = vld [vmem:[#allocation4 + $0x4] sm:$0xf]
    %v111 = vld [vmem:[#allocation4 + $0x8] sm:$0xf]
    %v112 = vld [vmem:[#allocation4 + $0xc] sm:$0xf]
    %v113 = vld [vmem:[#allocation4 + $0x10] sm:$0xf]
    %v114 = vld [vmem:[#allocation4 + $0x14] sm:$0xf]
    %v115 = vld [vmem:[#allocation4 + $0x18] sm:$0xf]
    %v116 = vld [vmem:[#allocation4 + $0x1c] sm:$0xf]
    %v117 = vld [vmem:[#allocation4 + $0x20] sm:$0xf]
    %v118 = vld [vmem:[#allocation4 + $0x24] sm:$0xf]
    %v119 = vld [vmem:[#allocation4 + $0x28] sm:$0xf]
    %v120 = vld [vmem:[#allocation4 + $0x2c] sm:$0xf]
    %v121 = vld [vmem:[#allocation4 + $0x30] sm:$0xf]
    %v122 = vld [vmem:[#allocation4 + $0x34] sm:$0xf]
    %v123 = vld [vmem:[#allocation4 + $0x38] sm:$0xf]
    %v124 = vld [vmem:[#allocation4 + $0x3c] sm:$0xf]
    %v125 = vld [vmem:[%s4] sm:$0x1]
    %v126 = vpack.c.bf16 %v108, %v108
    %v128 = vlaneseq
    %v129 = vshrl.u32 %v128, 7
    %v130 = vsub.s32 0, %v129
    %v131 = vrot.slane %v125, %v130
    %v149 = vunpack.c.l.b16 %v109
    %v150 = vunpack.c.l.b16 %v110
    %v151 = vunpack.c.l.b16 %v111
    %v152 = vunpack.c.l.b16 %v112
    %v153 = vunpack.c.l.b16 %v113
    %v154 = vunpack.c.l.b16 %v114
    %v155 = vunpack.c.l.b16 %v115
    %v156 = vunpack.c.l.b16 %v116
    %v157 = vunpack.c.l.b16 %v117
    %v158 = vunpack.c.l.b16 %v118
    %v159 = vunpack.c.l.b16 %v119
    %v160 = vunpack.c.l.b16 %v120
    %v161 = vunpack.c.l.b16 %v121
    %v162 = vunpack.c.l.b16 %v122
    %v163 = vunpack.c.l.b16 %v123
    %v164 = vunpack.c.l.b16 %v124
    %v165 = vpack.c.b16 %v150, %v149
    %v166 = vpack.c.b16 %v152, %v151
    %v167 = vpack.c.b16 %v154, %v153
    %v168 = vpack.c.b16 %v156, %v155
    %v169 = vpack.c.b16 %v158, %v157
    %v170 = vpack.c.b16 %v160, %v159
    %v171 = vpack.c.b16 %v162, %v161
    %v172 = vpack.c.b16 %v164, %v163
    %181 = vmatprep.subr.bf16.mxu0 0
    %182 = vmatpush1.bf16.msra.mxu0 %v172
    %183 = vmatprep.subr.bf16.mxu0 0
    %184 = vmatpush1.bf16.msra.mxu0 %v171
    %185 = vmatprep.subr.bf16.mxu0 0
    %186 = vmatpush1.bf16.msra.mxu0 %v170
    %187 = vmatprep.subr.bf16.mxu0 0
    %188 = vmatpush1.bf16.msra.mxu0 %v169
    %189 = vmatprep.subr.bf16.mxu0 0
    %190 = vmatpush1.bf16.msra.mxu0 %v168
    %191 = vmatprep.subr.bf16.mxu0 0
    %192 = vmatpush1.bf16.msra.mxu0 %v167
    %193 = vmatprep.subr.bf16.mxu0 0
    %194 = vmatpush1.bf16.msra.mxu0 %v166
    %195 = vmatprep.subr.bf16.mxu0 0
    %196 = vmatpush1.bf16.msra.mxu0 %v165
    %197 = vmatprep.subr.bf16.mxu0 0
    %198 = vmatpush2.bf16.msra.mxu0 0
    %199 = vmatprep.subr.bf16.mxu0 0
    %200 = vmatpush2.bf16.msra.mxu0 0
    %201 = vmatprep.subr.bf16.mxu0 0
    %202 = vmatpush2.bf16.msra.mxu0 0
    %203 = vmatprep.subr.bf16.mxu0 0
    %204 = vmatpush2.bf16.msra.mxu0 0
    %205 = vmatprep.subr.bf16.mxu0 0
    %206 = vmatpush2.bf16.msra.mxu0 0
    %207 = vmatprep.subr.bf16.mxu0 0
    %208 = vmatpush2.bf16.msra.mxu0 0
    %209 = vmatprep.subr.bf16.mxu0 0
    %210 = vmatpush2.bf16.msra.mxu0 0
    %211 = vmatprep.subr.bf16.mxu0 0
    %212 = vmatpush2.bf16.msra.mxu0 0
    %213 = vmatprep.mubr.bf16.mxu0 0
    %214 = vmatmul.mubr.bf16.gmra.mxu0 %v126
    %v215 = vpop.f32.mrf.mxu0
    %v216 = vadd.f32 %v131, %v215
    %v217 = vpop.f32.mrf.mxu0
    %v218 = vpop.f32.mrf.mxu0
    %v219 = vpop.f32.mrf.mxu0
    %220 = vdwg.mxu0
    %v221 = vmax.f32 %v216, 0.0
    %s222 = scalar_lea.vmem [#allocation4], 64
    %v223 = vld [vmem:[%s222] sm:$0xf]
    %v224 = vld [vmem:[%s222 + $0x4] sm:$0xf]
    %v225 = vld [vmem:[%s222 + $0x8] sm:$0xf]
    %v226 = vld [vmem:[%s222 + $0xc] sm:$0xf]
    %v227 = vld [vmem:[%s222 + $0x10] sm:$0xf]
    %v228 = vld [vmem:[%s222 + $0x14] sm:$0xf]
    %v229 = vld [vmem:[%s222 + $0x18] sm:$0xf]
    %v230 = vld [vmem:[%s222 + $0x1c] sm:$0xf]
    %v231 = vld [vmem:[%s222 + $0x20] sm:$0xf]
    %v232 = vld [vmem:[%s222 + $0x24] sm:$0xf]
    %v233 = vld [vmem:[%s222 + $0x28] sm:$0xf]
    %v234 = vld [vmem:[%s222 + $0x2c] sm:$0xf]
    %v235 = vld [vmem:[%s222 + $0x30] sm:$0xf]
    %v236 = vld [vmem:[%s222 + $0x34] sm:$0xf]
    %v237 = vld [vmem:[%s222 + $0x38] sm:$0xf]
    %v238 = vld [vmem:[%s222 + $0x3c] sm:$0xf]
    %s239 = scalar_lea.vmem %s4, 1
    %v240 = vld [vmem:[%s239] sm:$0x1]
    %v241 = vpack.c.bf16 %v221, %v221
    %v243 = vlaneseq
    %v244 = vshrl.u32 %v243, 7
    %v245 = vsub.s32 0, %v244
    %v246 = vrot.slane %v240, %v245
    %v264 = vunpack.c.l.b16 %v223
    %v265 = vunpack.c.l.b16 %v224
    %v266 = vunpack.c.l.b16 %v225
    %v267 = vunpack.c.l.b16 %v226
    %v268 = vunpack.c.l.b16 %v227
    %v269 = vunpack.c.l.b16 %v228
    %v270 = vunpack.c.l.b16 %v229
    %v271 = vunpack.c.l.b16 %v230
    %v272 = vunpack.c.l.b16 %v231
    %v273 = vunpack.c.l.b16 %v232
    %v274 = vunpack.c.l.b16 %v233
    %v275 = vunpack.c.l.b16 %v234
    %v276 = vunpack.c.l.b16 %v235
    %v277 = vunpack.c.l.b16 %v236
    %v278 = vunpack.c.l.b16 %v237
    %v279 = vunpack.c.l.b16 %v238
    %v280 = vpack.c.b16 %v265, %v264
    %v281 = vpack.c.b16 %v267, %v266
    %v282 = vpack.c.b16 %v269, %v268
    %v283 = vpack.c.b16 %v271, %v270
    %v284 = vpack.c.b16 %v273, %v272
    %v285 = vpack.c.b16 %v275, %v274
    %v286 = vpack.c.b16 %v277, %v276
    %v287 = vpack.c.b16 %v279, %v278
    %296 = vmatprep.subr.bf16.mxu0 0
    %297 = vmatpush1.bf16.msra.mxu0 %v287
    %298 = vmatprep.subr.bf16.mxu0 0
    %299 = vmatpush1.bf16.msra.mxu0 %v286
    %300 = vmatprep.subr.bf16.mxu0 0
    %301 = vmatpush1.bf16.msra.mxu0 %v285
    %302 = vmatprep.subr.bf16.mxu0 0
    %303 = vmatpush1.bf16.msra.mxu0 %v284
    %304 = vmatprep.subr.bf16.mxu0 0
    %305 = vmatpush1.bf16.msra.mxu0 %v283
    %306 = vmatprep.subr.bf16.mxu0 0
    %307 = vmatpush1.bf16.msra.mxu0 %v282
    %308 = vmatprep.subr.bf16.mxu0 0
    %309 = vmatpush1.bf16.msra.mxu0 %v281
    %310 = vmatprep.subr.bf16.mxu0 0
    %311 = vmatpush1.bf16.msra.mxu0 %v280
    %312 = vmatprep.subr.bf16.mxu0 0
    %313 = vmatpush2.bf16.msra.mxu0 0
    %314 = vmatprep.subr.bf16.mxu0 0
    %315 = vmatpush2.bf16.msra.mxu0 0
    %316 = vmatprep.subr.bf16.mxu0 0
    %317 = vmatpush2.bf16.msra.mxu0 0
    %318 = vmatprep.subr.bf16.mxu0 0
    %319 = vmatpush2.bf16.msra.mxu0 0
    %320 = vmatprep.subr.bf16.mxu0 0
    %321 = vmatpush2.bf16.msra.mxu0 0
    %322 = vmatprep.subr.bf16.mxu0 0
    %323 = vmatpush2.bf16.msra.mxu0 0
    %324 = vmatprep.subr.bf16.mxu0 0
    %325 = vmatpush2.bf16.msra.mxu0 0
    %326 = vmatprep.subr.bf16.mxu0 0
    %327 = vmatpush2.bf16.msra.mxu0 0
    %328 = vmatprep.mubr.bf16.mxu0 0
    %329 = vmatmul.mubr.bf16.gmra.mxu0 %v241
    %v330 = vpop.f32.mrf.mxu0
    %v331 = vadd.f32 %v246, %v330
    %v332 = vpop.f32.mrf.mxu0
    %v333 = vpop.f32.mrf.mxu0
    %v334 = vpop.f32.mrf.mxu0
    %335 = vdwg.mxu0
    %v336 = vmax.f32 %v331, 0.0
    %s337 = scalar_lea.vmem [#allocation4], 128
    %v338 = vld [vmem:[%s337] sm:$0xf]
    %v339 = vld [vmem:[%s337 + $0x4] sm:$0xf]
    %v340 = vld [vmem:[%s337 + $0x8] sm:$0xf]
    %v341 = vld [vmem:[%s337 + $0xc] sm:$0xf]
    %v342 = vld [vmem:[%s337 + $0x10] sm:$0xf]
    %v343 = vld [vmem:[%s337 + $0x14] sm:$0xf]
    %v344 = vld [vmem:[%s337 + $0x18] sm:$0xf]
    %v345 = vld [vmem:[%s337 + $0x1c] sm:$0xf]
    %v346 = vld [vmem:[%s337 + $0x20] sm:$0xf]
    %v347 = vld [vmem:[%s337 + $0x24] sm:$0xf]
    %v348 = vld [vmem:[%s337 + $0x28] sm:$0xf]
    %v349 = vld [vmem:[%s337 + $0x2c] sm:$0xf]
    %v350 = vld [vmem:[%s337 + $0x30] sm:$0xf]
    %v351 = vld [vmem:[%s337 + $0x34] sm:$0xf]
    %v352 = vld [vmem:[%s337 + $0x38] sm:$0xf]
    %v353 = vld [vmem:[%s337 + $0x3c] sm:$0xf]
    %s354 = scalar_lea.vmem %s4, 2
    %v355 = vld [vmem:[%s354] sm:$0x1]
    %v356 = vpack.c.bf16 %v336, %v336
    %v358 = vlaneseq
    %v359 = vshrl.u32 %v358, 7
    %v360 = vsub.s32 0, %v359
    %v361 = vrot.slane %v355, %v360
    %v379 = vunpack.c.l.b16 %v338
    %v380 = vunpack.c.l.b16 %v339
    %v381 = vunpack.c.l.b16 %v340
    %v382 = vunpack.c.l.b16 %v341
    %v383 = vunpack.c.l.b16 %v342
    %v384 = vunpack.c.l.b16 %v343
    %v385 = vunpack.c.l.b16 %v344
    %v386 = vunpack.c.l.b16 %v345
    %v387 = vunpack.c.l.b16 %v346
    %v388 = vunpack.c.l.b16 %v347
    %v389 = vunpack.c.l.b16 %v348
    %v390 = vunpack.c.l.b16 %v349
    %v391 = vunpack.c.l.b16 %v350
    %v392 = vunpack.c.l.b16 %v351
    %v393 = vunpack.c.l.b16 %v352
    %v394 = vunpack.c.l.b16 %v353
    %v395 = vpack.c.b16 %v380, %v379
    %v396 = vpack.c.b16 %v382, %v381
    %v397 = vpack.c.b16 %v384, %v383
    %v398 = vpack.c.b16 %v386, %v385
    %v399 = vpack.c.b16 %v388, %v387
    %v400 = vpack.c.b16 %v390, %v389
    %v401 = vpack.c.b16 %v392, %v391
    %v402 = vpack.c.b16 %v394, %v393
    %411 = vmatprep.subr.bf16.mxu0 0
    %412 = vmatpush1.bf16.msra.mxu0 %v402
    %413 = vmatprep.subr.bf16.mxu0 0
    %414 = vmatpush1.bf16.msra.mxu0 %v401
    %415 = vmatprep.subr.bf16.mxu0 0
    %416 = vmatpush1.bf16.msra.mxu0 %v400
    %417 = vmatprep.subr.bf16.mxu0 0
    %418 = vmatpush1.bf16.msra.mxu0 %v399
    %419 = vmatprep.subr.bf16.mxu0 0
    %420 = vmatpush1.bf16.msra.mxu0 %v398
    %421 = vmatprep.subr.bf16.mxu0 0
    %422 = vmatpush1.bf16.msra.mxu0 %v397
    %423 = vmatprep.subr.bf16.mxu0 0
    %424 = vmatpush1.bf16.msra.mxu0 %v396
    %425 = vmatprep.subr.bf16.mxu0 0
    %426 = vmatpush1.bf16.msra.mxu0 %v395
    %427 = vmatprep.subr.bf16.mxu0 0
    %428 = vmatpush2.bf16.msra.mxu0 0
    %429 = vmatprep.subr.bf16.mxu0 0
    %430 = vmatpush2.bf16.msra.mxu0 0
    %431 = vmatprep.subr.bf16.mxu0 0
    %432 = vmatpush2.bf16.msra.mxu0 0
    %433 = vmatprep.subr.bf16.mxu0 0
    %434 = vmatpush2.bf16.msra.mxu0 0
    %435 = vmatprep.subr.bf16.mxu0 0
    %436 = vmatpush2.bf16.msra.mxu0 0
    %437 = vmatprep.subr.bf16.mxu0 0
    %438 = vmatpush2.bf16.msra.mxu0 0
    %439 = vmatprep.subr.bf16.mxu0 0
    %440 = vmatpush2.bf16.msra.mxu0 0
    %441 = vmatprep.subr.bf16.mxu0 0
    %442 = vmatpush2.bf16.msra.mxu0 0
    %443 = vmatprep.mubr.bf16.mxu0 0
    %444 = vmatmul.mubr.bf16.gmra.mxu0 %v356
    %v445 = vpop.f32.mrf.mxu0
    %v446 = vadd.f32 %v361, %v445
    %v447 = vpop.f32.mrf.mxu0
    %v448 = vpop.f32.mrf.mxu0
    %v449 = vpop.f32.mrf.mxu0
    %450 = vdwg.mxu0
    %v451 = vmax.f32 %v446, 0.0
    %s452 = scalar_lea.vmem [#allocation4], 192
    %v453 = vld [vmem:[%s452] sm:$0xf]
    %v454 = vld [vmem:[%s452 + $0x4] sm:$0xf]
    %v455 = vld [vmem:[%s452 + $0x8] sm:$0xf]
    %v456 = vld [vmem:[%s452 + $0xc] sm:$0xf]
    %v457 = vld [vmem:[%s452 + $0x10] sm:$0xf]
    %v458 = vld [vmem:[%s452 + $0x14] sm:$0xf]
    %v459 = vld [vmem:[%s452 + $0x18] sm:$0xf]
    %v460 = vld [vmem:[%s452 + $0x1c] sm:$0xf]
    %v461 = vld [vmem:[%s452 + $0x20] sm:$0xf]
    %v462 = vld [vmem:[%s452 + $0x24] sm:$0xf]
    %v463 = vld [vmem:[%s452 + $0x28] sm:$0xf]
    %v464 = vld [vmem:[%s452 + $0x2c] sm:$0xf]
    %v465 = vld [vmem:[%s452 + $0x30] sm:$0xf]
    %v466 = vld [vmem:[%s452 + $0x34] sm:$0xf]
    %v467 = vld [vmem:[%s452 + $0x38] sm:$0xf]
    %v468 = vld [vmem:[%s452 + $0x3c] sm:$0xf]
    %s469 = scalar_lea.vmem %s4, 3
    %v470 = vld [vmem:[%s469] sm:$0x1]
    %v471 = vpack.c.bf16 %v451, %v451
    %v473 = vlaneseq
    %v474 = vshrl.u32 %v473, 7
    %v475 = vsub.s32 0, %v474
    %v476 = vrot.slane %v470, %v475
    %v494 = vunpack.c.l.b16 %v453
    %v495 = vunpack.c.l.b16 %v454
    %v496 = vunpack.c.l.b16 %v455
    %v497 = vunpack.c.l.b16 %v456
    %v498 = vunpack.c.l.b16 %v457
    %v499 = vunpack.c.l.b16 %v458
    %v500 = vunpack.c.l.b16 %v459
    %v501 = vunpack.c.l.b16 %v460
    %v502 = vunpack.c.l.b16 %v461
    %v503 = vunpack.c.l.b16 %v462
    %v504 = vunpack.c.l.b16 %v463
    %v505 = vunpack.c.l.b16 %v464
    %v506 = vunpack.c.l.b16 %v465
    %v507 = vunpack.c.l.b16 %v466
    %v508 = vunpack.c.l.b16 %v467
    %v509 = vunpack.c.l.b16 %v468
    %v510 = vpack.c.b16 %v495, %v494
    %v511 = vpack.c.b16 %v497, %v496
    %v512 = vpack.c.b16 %v499, %v498
    %v513 = vpack.c.b16 %v501, %v500
    %v514 = vpack.c.b16 %v503, %v502
    %v515 = vpack.c.b16 %v505, %v504
    %v516 = vpack.c.b16 %v507, %v506
    %v517 = vpack.c.b16 %v509, %v508
    %526 = vmatprep.subr.bf16.mxu0 0
    %527 = vmatpush1.bf16.msra.mxu0 %v517
    %528 = vmatprep.subr.bf16.mxu0 0
    %529 = vmatpush1.bf16.msra.mxu0 %v516
    %530 = vmatprep.subr.bf16.mxu0 0
    %531 = vmatpush1.bf16.msra.mxu0 %v515
    %532 = vmatprep.subr.bf16.mxu0 0
    %533 = vmatpush1.bf16.msra.mxu0 %v514
    %534 = vmatprep.subr.bf16.mxu0 0
    %535 = vmatpush1.bf16.msra.mxu0 %v513
    %536 = vmatprep.subr.bf16.mxu0 0
    %537 = vmatpush1.bf16.msra.mxu0 %v512
    %538 = vmatprep.subr.bf16.mxu0 0
    %539 = vmatpush1.bf16.msra.mxu0 %v511
    %540 = vmatprep.subr.bf16.mxu0 0
    %541 = vmatpush1.bf16.msra.mxu0 %v510
    %542 = vmatprep.subr.bf16.mxu0 0
    %543 = vmatpush2.bf16.msra.mxu0 0
    %544 = vmatprep.subr.bf16.mxu0 0
    %545 = vmatpush2.bf16.msra.mxu0 0
    %546 = vmatprep.subr.bf16.mxu0 0
    %547 = vmatpush2.bf16.msra.mxu0 0
    %548 = vmatprep.subr.bf16.mxu0 0
    %549 = vmatpush2.bf16.msra.mxu0 0
    %550 = vmatprep.subr.bf16.mxu0 0
    %551 = vmatpush2.bf16.msra.mxu0 0
    %552 = vmatprep.subr.bf16.mxu0 0
    %553 = vmatpush2.bf16.msra.mxu0 0
    %554 = vmatprep.subr.bf16.mxu0 0
    %555 = vmatpush2.bf16.msra.mxu0 0
    %556 = vmatprep.subr.bf16.mxu0 0
    %557 = vmatpush2.bf16.msra.mxu0 0
    %558 = vmatprep.mubr.bf16.mxu0 0
    %559 = vmatmul.mubr.bf16.gmra.mxu0 %v471
    %v560 = vpop.f32.mrf.mxu0
    %v561 = vadd.f32 %v476, %v560
    %v562 = vpop.f32.mrf.mxu0
    %v563 = vpop.f32.mrf.mxu0
    %v564 = vpop.f32.mrf.mxu0
    %565 = vdwg.mxu0
    %v566 = vmax.f32 %v561, 0.0
    %v567 = vadd.f32 %v566, %v221
    %s568 = scalar_lea.vmem [#allocation4], 256
    %v569 = vld [vmem:[%s568] sm:$0xf]
    %v570 = vld [vmem:[%s568 + $0x4] sm:$0xf]
    %v571 = vld [vmem:[%s568 + $0x8] sm:$0xf]
    %v572 = vld [vmem:[%s568 + $0xc] sm:$0xf]
    %v573 = vld [vmem:[%s568 + $0x10] sm:$0xf]
    %v574 = vld [vmem:[%s568 + $0x14] sm:$0xf]
    %v575 = vld [vmem:[%s568 + $0x18] sm:$0xf]
    %v576 = vld [vmem:[%s568 + $0x1c] sm:$0xf]
    %v577 = vld [vmem:[%s568 + $0x20] sm:$0xf]
    %v578 = vld [vmem:[%s568 + $0x24] sm:$0xf]
    %v579 = vld [vmem:[%s568 + $0x28] sm:$0xf]
    %v580 = vld [vmem:[%s568 + $0x2c] sm:$0xf]
    %v581 = vld [vmem:[%s568 + $0x30] sm:$0xf]
    %v582 = vld [vmem:[%s568 + $0x34] sm:$0xf]
    %v583 = vld [vmem:[%s568 + $0x38] sm:$0xf]
    %v584 = vld [vmem:[%s568 + $0x3c] sm:$0xf]
    %s585 = scalar_lea.vmem %s4, 4
    %v586 = vld [vmem:[%s585] sm:$0x1]
    %v587 = vpack.c.bf16 %v567, %v567
    %v589 = vlaneseq
    %v590 = vshrl.u32 %v589, 7
    %v591 = vsub.s32 0, %v590
    %v592 = vrot.slane %v586, %v591
    %v610 = vunpack.c.l.b16 %v569
    %v611 = vunpack.c.l.b16 %v570
    %v612 = vunpack.c.l.b16 %v571
    %v613 = vunpack.c.l.b16 %v572
    %v614 = vunpack.c.l.b16 %v573
    %v615 = vunpack.c.l.b16 %v574
    %v616 = vunpack.c.l.b16 %v575
    %v617 = vunpack.c.l.b16 %v576
    %v618 = vunpack.c.l.b16 %v577
    %v619 = vunpack.c.l.b16 %v578
    %v620 = vunpack.c.l.b16 %v579
    %v621 = vunpack.c.l.b16 %v580
    %v622 = vunpack.c.l.b16 %v581
    %v623 = vunpack.c.l.b16 %v582
    %v624 = vunpack.c.l.b16 %v583
    %v625 = vunpack.c.l.b16 %v584
    %v626 = vpack.c.b16 %v611, %v610
    %v627 = vpack.c.b16 %v613, %v612
    %v628 = vpack.c.b16 %v615, %v614
    %v629 = vpack.c.b16 %v617, %v616
    %v630 = vpack.c.b16 %v619, %v618
    %v631 = vpack.c.b16 %v621, %v620
    %v632 = vpack.c.b16 %v623, %v622
    %v633 = vpack.c.b16 %v625, %v624
    %642 = vmatprep.subr.bf16.mxu0 0
    %643 = vmatpush1.bf16.msra.mxu0 %v633
    %644 = vmatprep.subr.bf16.mxu0 0
    %645 = vmatpush1.bf16.msra.mxu0 %v632
    %646 = vmatprep.subr.bf16.mxu0 0
    %647 = vmatpush1.bf16.msra.mxu0 %v631
    %648 = vmatprep.subr.bf16.mxu0 0
    %649 = vmatpush1.bf16.msra.mxu0 %v630
    %650 = vmatprep.subr.bf16.mxu0 0
    %651 = vmatpush1.bf16.msra.mxu0 %v629
    %652 = vmatprep.subr.bf16.mxu0 0
    %653 = vmatpush1.bf16.msra.mxu0 %v628
    %654 = vmatprep.subr.bf16.mxu0 0
    %655 = vmatpush1.bf16.msra.mxu0 %v627
    %656 = vmatprep.subr.bf16.mxu0 0
    %657 = vmatpush1.bf16.msra.mxu0 %v626
    %658 = vmatprep.subr.bf16.mxu0 0
    %659 = vmatpush2.bf16.msra.mxu0 0
    %660 = vmatprep.subr.bf16.mxu0 0
    %661 = vmatpush2.bf16.msra.mxu0 0
    %662 = vmatprep.subr.bf16.mxu0 0
    %663 = vmatpush2.bf16.msra.mxu0 0
    %664 = vmatprep.subr.bf16.mxu0 0
    %665 = vmatpush2.bf16.msra.mxu0 0
    %666 = vmatprep.subr.bf16.mxu0 0
    %667 = vmatpush2.bf16.msra.mxu0 0
    %668 = vmatprep.subr.bf16.mxu0 0
    %669 = vmatpush2.bf16.msra.mxu0 0
    %670 = vmatprep.subr.bf16.mxu0 0
    %671 = vmatpush2.bf16.msra.mxu0 0
    %672 = vmatprep.subr.bf16.mxu0 0
    %673 = vmatpush2.bf16.msra.mxu0 0
    %674 = vmatprep.mubr.bf16.mxu0 0
    %675 = vmatmul.mubr.bf16.gmra.mxu0 %v587
    %v676 = vpop.f32.mrf.mxu0
    %v677 = vadd.f32 %v592, %v676
    %v678 = vpop.f32.mrf.mxu0
    %v679 = vpop.f32.mrf.mxu0
    %v680 = vpop.f32.mrf.mxu0
    %681 = vdwg.mxu0
    %v682 = vmax.f32 %v677, 0.0
    %s683 = scalar_lea.vmem [#allocation4], 320
    %v684 = vld [vmem:[%s683] sm:$0xf]
    %v685 = vld [vmem:[%s683 + $0x4] sm:$0xf]
    %v686 = vld [vmem:[%s683 + $0x8] sm:$0xf]
    %v687 = vld [vmem:[%s683 + $0xc] sm:$0xf]
    %v688 = vld [vmem:[%s683 + $0x10] sm:$0xf]
    %v689 = vld [vmem:[%s683 + $0x14] sm:$0xf]
    %v690 = vld [vmem:[%s683 + $0x18] sm:$0xf]
    %v691 = vld [vmem:[%s683 + $0x1c] sm:$0xf]
    %v692 = vld [vmem:[%s683 + $0x20] sm:$0xf]
    %v693 = vld [vmem:[%s683 + $0x24] sm:$0xf]
    %v694 = vld [vmem:[%s683 + $0x28] sm:$0xf]
    %v695 = vld [vmem:[%s683 + $0x2c] sm:$0xf]
    %v696 = vld [vmem:[%s683 + $0x30] sm:$0xf]
    %v697 = vld [vmem:[%s683 + $0x34] sm:$0xf]
    %v698 = vld [vmem:[%s683 + $0x38] sm:$0xf]
    %v699 = vld [vmem:[%s683 + $0x3c] sm:$0xf]
    %s700 = scalar_lea.vmem %s4, 5
    %v701 = vld [vmem:[%s700] sm:$0x1]
    %v702 = vpack.c.bf16 %v682, %v682
    %v704 = vlaneseq
    %v705 = vshrl.u32 %v704, 7
    %v706 = vsub.s32 0, %v705
    %v707 = vrot.slane %v701, %v706
    %v725 = vunpack.c.l.b16 %v684
    %v726 = vunpack.c.l.b16 %v685
    %v727 = vunpack.c.l.b16 %v686
    %v728 = vunpack.c.l.b16 %v687
    %v729 = vunpack.c.l.b16 %v688
    %v730 = vunpack.c.l.b16 %v689
    %v731 = vunpack.c.l.b16 %v690
    %v732 = vunpack.c.l.b16 %v691
    %v733 = vunpack.c.l.b16 %v692
    %v734 = vunpack.c.l.b16 %v693
    %v735 = vunpack.c.l.b16 %v694
    %v736 = vunpack.c.l.b16 %v695
    %v737 = vunpack.c.l.b16 %v696
    %v738 = vunpack.c.l.b16 %v697
    %v739 = vunpack.c.l.b16 %v698
    %v740 = vunpack.c.l.b16 %v699
    %v741 = vpack.c.b16 %v726, %v725
    %v742 = vpack.c.b16 %v728, %v727
    %v743 = vpack.c.b16 %v730, %v729
    %v744 = vpack.c.b16 %v732, %v731
    %v745 = vpack.c.b16 %v734, %v733
    %v746 = vpack.c.b16 %v736, %v735
    %v747 = vpack.c.b16 %v738, %v737
    %v748 = vpack.c.b16 %v740, %v739
    %757 = vmatprep.subr.bf16.mxu0 0
    %758 = vmatpush1.bf16.msra.mxu0 %v748
    %759 = vmatprep.subr.bf16.mxu0 0
    %760 = vmatpush1.bf16.msra.mxu0 %v747
    %761 = vmatprep.subr.bf16.mxu0 0
    %762 = vmatpush1.bf16.msra.mxu0 %v746
    %763 = vmatprep.subr.bf16.mxu0 0
    %764 = vmatpush1.bf16.msra.mxu0 %v745
    %765 = vmatprep.subr.bf16.mxu0 0
    %766 = vmatpush1.bf16.msra.mxu0 %v744
    %767 = vmatprep.subr.bf16.mxu0 0
    %768 = vmatpush1.bf16.msra.mxu0 %v743
    %769 = vmatprep.subr.bf16.mxu0 0
    %770 = vmatpush1.bf16.msra.mxu0 %v742
    %771 = vmatprep.subr.bf16.mxu0 0
    %772 = vmatpush1.bf16.msra.mxu0 %v741
    %773 = vmatprep.subr.bf16.mxu0 0
    %774 = vmatpush2.bf16.msra.mxu0 0
    %775 = vmatprep.subr.bf16.mxu0 0
    %776 = vmatpush2.bf16.msra.mxu0 0
    %777 = vmatprep.subr.bf16.mxu0 0
    %778 = vmatpush2.bf16.msra.mxu0 0
    %779 = vmatprep.subr.bf16.mxu0 0
    %780 = vmatpush2.bf16.msra.mxu0 0
    %781 = vmatprep.subr.bf16.mxu0 0
    %782 = vmatpush2.bf16.msra.mxu0 0
    %783 = vmatprep.subr.bf16.mxu0 0
    %784 = vmatpush2.bf16.msra.mxu0 0
    %785 = vmatprep.subr.bf16.mxu0 0
    %786 = vmatpush2.bf16.msra.mxu0 0
    %787 = vmatprep.subr.bf16.mxu0 0
    %788 = vmatpush2.bf16.msra.mxu0 0
    %789 = vmatprep.mubr.bf16.mxu0 0
    %790 = vmatmul.mubr.bf16.gmra.mxu0 %v702
    %v791 = vpop.f32.mrf.mxu0
    %v792 = vadd.f32 %v707, %v791
    %v793 = vpop.f32.mrf.mxu0
    %v794 = vpop.f32.mrf.mxu0
    %v795 = vpop.f32.mrf.mxu0
    %796 = vdwg.mxu0
    %v797 = vmax.f32 %v792, 0.0
    %s798 = scalar_lea.vmem [#allocation4], 384
    %v799 = vld [vmem:[%s798] sm:$0xf]
    %v800 = vld [vmem:[%s798 + $0x4] sm:$0xf]
    %v801 = vld [vmem:[%s798 + $0x8] sm:$0xf]
    %v802 = vld [vmem:[%s798 + $0xc] sm:$0xf]
    %v803 = vld [vmem:[%s798 + $0x10] sm:$0xf]
    %v804 = vld [vmem:[%s798 + $0x14] sm:$0xf]
    %v805 = vld [vmem:[%s798 + $0x18] sm:$0xf]
    %v806 = vld [vmem:[%s798 + $0x1c] sm:$0xf]
    %v807 = vld [vmem:[%s798 + $0x20] sm:$0xf]
    %v808 = vld [vmem:[%s798 + $0x24] sm:$0xf]
    %v809 = vld [vmem:[%s798 + $0x28] sm:$0xf]
    %v810 = vld [vmem:[%s798 + $0x2c] sm:$0xf]
    %v811 = vld [vmem:[%s798 + $0x30] sm:$0xf]
    %v812 = vld [vmem:[%s798 + $0x34] sm:$0xf]
    %v813 = vld [vmem:[%s798 + $0x38] sm:$0xf]
    %v814 = vld [vmem:[%s798 + $0x3c] sm:$0xf]
    %s815 = scalar_lea.vmem %s4, 6
    %v816 = vld [vmem:[%s815] sm:$0x1]
    %v817 = vpack.c.bf16 %v797, %v797
    %v819 = vlaneseq
    %v820 = vshrl.u32 %v819, 7
    %v821 = vsub.s32 0, %v820
    %v822 = vrot.slane %v816, %v821
    %v840 = vunpack.c.l.b16 %v799
    %v841 = vunpack.c.l.b16 %v800
    %v842 = vunpack.c.l.b16 %v801
    %v843 = vunpack.c.l.b16 %v802
    %v844 = vunpack.c.l.b16 %v803
    %v845 = vunpack.c.l.b16 %v804
    %v846 = vunpack.c.l.b16 %v805
    %v847 = vunpack.c.l.b16 %v806
    %v848 = vunpack.c.l.b16 %v807
    %v849 = vunpack.c.l.b16 %v808
    %v850 = vunpack.c.l.b16 %v809
    %v851 = vunpack.c.l.b16 %v810
    %v852 = vunpack.c.l.b16 %v811
    %v853 = vunpack.c.l.b16 %v812
    %v854 = vunpack.c.l.b16 %v813
    %v855 = vunpack.c.l.b16 %v814
    %v856 = vpack.c.b16 %v841, %v840
    %v857 = vpack.c.b16 %v843, %v842
    %v858 = vpack.c.b16 %v845, %v844
    %v859 = vpack.c.b16 %v847, %v846
    %v860 = vpack.c.b16 %v849, %v848
    %v861 = vpack.c.b16 %v851, %v850
    %v862 = vpack.c.b16 %v853, %v852
    %v863 = vpack.c.b16 %v855, %v854
    %872 = vmatprep.subr.bf16.mxu0 0
    %873 = vmatpush1.bf16.msra.mxu0 %v863
    %874 = vmatprep.subr.bf16.mxu0 0
    %875 = vmatpush1.bf16.msra.mxu0 %v862
    %876 = vmatprep.subr.bf16.mxu0 0
    %877 = vmatpush1.bf16.msra.mxu0 %v861
    %878 = vmatprep.subr.bf16.mxu0 0
    %879 = vmatpush1.bf16.msra.mxu0 %v860
    %880 = vmatprep.subr.bf16.mxu0 0
    %881 = vmatpush1.bf16.msra.mxu0 %v859
    %882 = vmatprep.subr.bf16.mxu0 0
    %883 = vmatpush1.bf16.msra.mxu0 %v858
    %884 = vmatprep.subr.bf16.mxu0 0
    %885 = vmatpush1.bf16.msra.mxu0 %v857
    %886 = vmatprep.subr.bf16.mxu0 0
    %887 = vmatpush1.bf16.msra.mxu0 %v856
    %888 = vmatprep.subr.bf16.mxu0 0
    %889 = vmatpush2.bf16.msra.mxu0 0
    %890 = vmatprep.subr.bf16.mxu0 0
    %891 = vmatpush2.bf16.msra.mxu0 0
    %892 = vmatprep.subr.bf16.mxu0 0
    %893 = vmatpush2.bf16.msra.mxu0 0
    %894 = vmatprep.subr.bf16.mxu0 0
    %895 = vmatpush2.bf16.msra.mxu0 0
    %896 = vmatprep.subr.bf16.mxu0 0
    %897 = vmatpush2.bf16.msra.mxu0 0
    %898 = vmatprep.subr.bf16.mxu0 0
    %899 = vmatpush2.bf16.msra.mxu0 0
    %900 = vmatprep.subr.bf16.mxu0 0
    %901 = vmatpush2.bf16.msra.mxu0 0
    %902 = vmatprep.subr.bf16.mxu0 0
    %903 = vmatpush2.bf16.msra.mxu0 0
    %904 = vmatprep.mubr.bf16.mxu0 0
    %905 = vmatmul.mubr.bf16.gmra.mxu0 %v817
    %v906 = vpop.f32.mrf.mxu0
    %v907 = vadd.f32 %v822, %v906
    %v908 = vpop.f32.mrf.mxu0
    %v909 = vpop.f32.mrf.mxu0
    %v910 = vpop.f32.mrf.mxu0
    %911 = vdwg.mxu0
    %v912 = vmax.f32 %v907, 0.0
    %v913 = vadd.f32 %v912, %v567
    %s914 = scalar_lea.vmem [#allocation4], 448
    %v915 = vld [vmem:[%s914] sm:$0xf]
    %v916 = vld [vmem:[%s914 + $0x4] sm:$0xf]
    %v917 = vld [vmem:[%s914 + $0x8] sm:$0xf]
    %v918 = vld [vmem:[%s914 + $0xc] sm:$0xf]
    %v919 = vld [vmem:[%s914 + $0x10] sm:$0xf]
    %v920 = vld [vmem:[%s914 + $0x14] sm:$0xf]
    %v921 = vld [vmem:[%s914 + $0x18] sm:$0xf]
    %v922 = vld [vmem:[%s914 + $0x1c] sm:$0xf]
    %v923 = vld [vmem:[%s914 + $0x20] sm:$0xf]
    %v924 = vld [vmem:[%s914 + $0x24] sm:$0xf]
    %v925 = vld [vmem:[%s914 + $0x28] sm:$0xf]
    %v926 = vld [vmem:[%s914 + $0x2c] sm:$0xf]
    %v927 = vld [vmem:[%s914 + $0x30] sm:$0xf]
    %v928 = vld [vmem:[%s914 + $0x34] sm:$0xf]
    %v929 = vld [vmem:[%s914 + $0x38] sm:$0xf]
    %v930 = vld [vmem:[%s914 + $0x3c] sm:$0xf]
    %s931 = scalar_lea.vmem %s4, 7
    %v932 = vld [vmem:[%s931] sm:$0x1]
    %v933 = vpack.c.bf16 %v913, %v913
    %v935 = vlaneseq
    %v936 = vshrl.u32 %v935, 7
    %v937 = vsub.s32 0, %v936
    %v938 = vrot.slane %v932, %v937
    %v956 = vunpack.c.l.b16 %v915
    %v957 = vunpack.c.l.b16 %v916
    %v958 = vunpack.c.l.b16 %v917
    %v959 = vunpack.c.l.b16 %v918
    %v960 = vunpack.c.l.b16 %v919
    %v961 = vunpack.c.l.b16 %v920
    %v962 = vunpack.c.l.b16 %v921
    %v963 = vunpack.c.l.b16 %v922
    %v964 = vunpack.c.l.b16 %v923
    %v965 = vunpack.c.l.b16 %v924
    %v966 = vunpack.c.l.b16 %v925
    %v967 = vunpack.c.l.b16 %v926
    %v968 = vunpack.c.l.b16 %v927
    %v969 = vunpack.c.l.b16 %v928
    %v970 = vunpack.c.l.b16 %v929
    %v971 = vunpack.c.l.b16 %v930
    %v972 = vpack.c.b16 %v957, %v956
    %v973 = vpack.c.b16 %v959, %v958
    %v974 = vpack.c.b16 %v961, %v960
    %v975 = vpack.c.b16 %v963, %v962
    %v976 = vpack.c.b16 %v965, %v964
    %v977 = vpack.c.b16 %v967, %v966
    %v978 = vpack.c.b16 %v969, %v968
    %v979 = vpack.c.b16 %v971, %v970
    %988 = vmatprep.subr.bf16.mxu0 0
    %989 = vmatpush1.bf16.msra.mxu0 %v979
    %990 = vmatprep.subr.bf16.mxu0 0
    %991 = vmatpush1.bf16.msra.mxu0 %v978
    %992 = vmatprep.subr.bf16.mxu0 0
    %993 = vmatpush1.bf16.msra.mxu0 %v977
    %994 = vmatprep.subr.bf16.mxu0 0
    %995 = vmatpush1.bf16.msra.mxu0 %v976
    %996 = vmatprep.subr.bf16.mxu0 0
    %997 = vmatpush1.bf16.msra.mxu0 %v975
    %998 = vmatprep.subr.bf16.mxu0 0
    %999 = vmatpush1.bf16.msra.mxu0 %v974
    %1000 = vmatprep.subr.bf16.mxu0 0
    %1001 = vmatpush1.bf16.msra.mxu0 %v973
    %1002 = vmatprep.subr.bf16.mxu0 0
    %1003 = vmatpush1.bf16.msra.mxu0 %v972
    %1004 = vmatprep.subr.bf16.mxu0 0
    %1005 = vmatpush2.bf16.msra.mxu0 0
    %1006 = vmatprep.subr.bf16.mxu0 0
    %1007 = vmatpush2.bf16.msra.mxu0 0
    %1008 = vmatprep.subr.bf16.mxu0 0
    %1009 = vmatpush2.bf16.msra.mxu0 0
    %1010 = vmatprep.subr.bf16.mxu0 0
    %1011 = vmatpush2.bf16.msra.mxu0 0
    %1012 = vmatprep.subr.bf16.mxu0 0
    %1013 = vmatpush2.bf16.msra.mxu0 0
    %1014 = vmatprep.subr.bf16.mxu0 0
    %1015 = vmatpush2.bf16.msra.mxu0 0
    %1016 = vmatprep.subr.bf16.mxu0 0
    %1017 = vmatpush2.bf16.msra.mxu0 0
    %1018 = vmatprep.subr.bf16.mxu0 0
    %1019 = vmatpush2.bf16.msra.mxu0 0
    %1020 = vmatprep.mubr.bf16.mxu0 0
    %1021 = vmatmul.mubr.bf16.gmra.mxu0 %v933
    %v1022 = vpop.f32.mrf.mxu0
    %v1023 = vadd.f32 %v938, %v1022
    %v1024 = vpop.f32.mrf.mxu0
    %v1025 = vpop.f32.mrf.mxu0
    %v1026 = vpop.f32.mrf.mxu0
    %1027 = vdwg.mxu0
    %1028 = vst [vmem:[%s5] sm:$0xff] %v1023
    // Predicated region
    $region30: #{net_finger_forward.1} parent=1 // pred_check
      _
    $region31: #{net_finger_forward.1} parent=1 // pred_check_branch
      %1030 = sbr.rel (0) target = $region33
    $region32: #{net_finger_forward.1} parent=1 // pred_region
      _
    $region33: #{net_finger_forward.1} parent=1 // pred_fallthru
      _
    // Predicated region
    $region34: #{net_finger_forward.1} parent=1 // pred_check
      _
    $region35: #{net_finger_forward.1} parent=1 // pred_check_branch
      %1032 = sbr.rel (0) target = $region37
    $region36: #{net_finger_forward.1} parent=1 // pred_region
      _
    $region37: #{net_finger_forward.1} parent=1 // pred_fallthru
      _
    %1033 = vsyncpa [#allocation3], 1
    %1034 = vsyncpa [#allocation5], 1

</llo_original>
